<compile_context>
chip_gen: v7x
topology: tpu7x:2x2x1
jax: 0.10.0
libtpu: 0.0.40
codegen_flags: <defaults>
</compile_context>

<pallas_src>
import functools

import jax
import jax.numpy as jnp
from jax.experimental import pallas as pl
from jax.experimental.pallas import tpu as pltpu


def _sum_all_2d(x):
    """Reduce a (R, L) tile to (1, 1): lane reduce then sublane reduce (XLU)."""
    return jnp.sum(jnp.sum(x, axis=-1, keepdims=True), axis=0, keepdims=True)


def _log_softmax_rows(x):
    """Numerically stable log_softmax over the last (lane) axis."""
    m = jnp.max(x, axis=-1, keepdims=True)
    z = x - m
    return z - jnp.log(jnp.sum(jnp.exp(z), axis=-1, keepdims=True))


def _softmax_parts(x):
    """Return (softmax, log_softmax) over the last axis, computing exp() once."""
    m = jnp.max(x, axis=-1, keepdims=True)
    z = x - m
    e = jnp.exp(z)
    se = jnp.sum(e, axis=-1, keepdims=True)
    log_p = z - jnp.log(se)
    p = e * (1.0 / se)          # per-row reciprocal, then a broadcast multiply
    return p, log_p


def _bkl_kernel(s_ref, t_ref, *out_refs, inv_temp_f, inv_temp_r,
                compute_reverse, shared_temps, rows_total, block_rows,
                need_row_mask):
    fwd_ref = out_refs[0]
    rev_ref = out_refs[1] if compute_reverse else None

    core = pl.program_id(0)          # TensorCore split ("parallel")
    i = pl.program_id(1)             # row tile within this core ("arbitrary")
    ni = pl.num_programs(1)

    # Outputs double as accumulators: their block index only depends on the
    # parallel axis, so the (8,128) tiles stay VMEM-resident across `i`.
    @pl.when(i == 0)
    def _():
        fwd_ref[...] = jnp.zeros_like(fwd_ref)
        if compute_reverse:
            rev_ref[...] = jnp.zeros_like(rev_ref)

    s = s_ref[...].astype(jnp.float32)
    t = t_ref[...].astype(jnp.float32)

    if need_row_mask:
        # Ragged / overflow tiles: mask out-of-range rows to zero BEFORE any
        # exp/log (keeps everything finite).  Identical all-zero S/T rows give
        # identical uniform softmaxes -> exactly 0 KL contribution.
        # (block_rows, 1) sublane-only iota; the where broadcasts across lanes.
        row0 = (core * ni + i) * block_rows
        rows = row0 + jax.lax.broadcasted_iota(jnp.int32, (block_rows, 1), 0)
        valid = rows < rows_total
        s = jnp.where(valid, s, 0.0)
        t = jnp.where(valid, t, 0.0)

    if shared_temps:
        # temp_stu == temp_tea: one set of softmaxes feeds both KL directions.
        p_s, ls_s = _softmax_parts(s * inv_temp_f)
        p_t, ls_t = _softmax_parts(t * inv_temp_f)
        fwd_ref[...] += jnp.broadcast_to(
            _sum_all_2d(p_t * (ls_t - ls_s)), (8, 128))
        rev_ref[...] += jnp.broadcast_to(
            _sum_all_2d(p_s * (ls_s - ls_t)), (8, 128))
    else:
        # forward term: KL(T || S) at temperature temp_stu
        p_t, ls_t = _softmax_parts(t * inv_temp_f)
        ls_s = _log_softmax_rows(s * inv_temp_f)
        fwd_ref[...] += jnp.broadcast_to(
            _sum_all_2d(p_t * (ls_t - ls_s)), (8, 128))
        if compute_reverse:
            # reverse term: KL(S || T) at temperature temp_tea
            p_s, ls_s_r = _softmax_parts(s * inv_temp_r)
            ls_t_r = _log_softmax_rows(t * inv_temp_r)
            rev_ref[...] += jnp.broadcast_to(
                _sum_all_2d(p_s * (ls_s_r - ls_t_r)), (8, 128))


def _vmem_capacity_bytes():
    try:
        return int(getattr(pltpu.get_tpu_info(), "vmem_capacity_bytes"))
    except Exception:
        return 64 << 20            # conservative (v7x-shaped) fallback


def _round8_down(x):
    return max(8, (x // 8) * 8)


def _pick_block_rows(R, L, split, target_bytes):
    """Row-tile size: big enough to amortize per-step overhead, small enough to
    leave >=4 pipelined steps per core and >= `split` tiles total."""
    if R < 8:
        return R                                  # full-extent block only option
    cap_bytes = max(1, target_bytes // (4 * L))   # f32 bytes budget per input block
    cap_steps = -(-R // (split * 4))              # aim for >=4 tiles per core
    cap_split = -(-R // split)                    # guarantee >= split tiles
    b = _round8_down(min(cap_bytes, cap_steps, cap_split, R))
    # Prefer a nearby block that divides R with a tile count divisible by
    # `split` (the masking branch then compiles away), staying within 2x.
    if R % 8 == 0:
        lo = max(8, ((b // 2) // 8) * 8)
        for cand in range(b, lo - 1, -8):
            if R % cand == 0 and (R // cand) % split == 0:
                return cand
    return b


def _in_spec(shape, index_map, depth):
    if depth <= 2:
        return pl.BlockSpec(shape, index_map)
    try:
        return pl.BlockSpec(shape, index_map, pipeline_mode=pl.Buffered(depth))
    except (TypeError, AttributeError):       # older BlockSpec without pipeline_mode
        return pl.BlockSpec(shape, index_map)


def balance_kl_divergence(preds_S, preds_T, gt_bboxes=None, image_metas=None, *,
                          temp_stu=1.0, temp_tea=1.0, weight=1.0, reverse=0.0,
                          name="neck", block_rows=None):
    """Forward pass of BalanceKLDivergence (align=None, non-'bev' name)."""
    if preds_S.shape[-2:] != preds_T.shape[-2:]:
        # TODO(synk): bilinear interpolation with align_corners=True (teacher resize) not implemented
        raise NotImplementedError("teacher/student spatial sizes must match")
    assert "bev" not in name, "bev adapter branch not exercised in this synthetic kernel"
    n, c, h, w = preds_S.shape
    assert preds_T.shape[1] == c, "align==None path requires equal channel counts"

    R, L = n * c, h * w
    # No pad, no astype: read the originals once; the kernel upcasts per tile.
    s = preds_S.reshape(R, L)
    t = preds_T.reshape(R, L)

    # Generation-aware sizing: 128 MiB VMEM parts (v5e/v6e) get bigger input
    # blocks and a higher vmem cap; 64 MiB parts (v7x) keep the tight budget.
    vmem_cap = _vmem_capacity_bytes()
    big_vmem = vmem_cap >= (100 << 20)
    target_bytes = (4 << 20) if big_vmem else (2 << 20)
    vmem_cap_limit = (96 << 20) if big_vmem else (48 << 20)

    # Unconditional 2-way TensorCore split whenever there is enough work for two
    # tiles; on single-core chips the leading "parallel" axis is just a loop.
    split = 2 if R > 8 else 1

    if block_rows is None:
        block_rows = _pick_block_rows(R, L, split, target_bytes)
    else:
        block_rows = int(block_rows)
        if block_rows >= R or R < 8:
            block_rows = R
        else:
            block_rows = _round8_down(block_rows)

    total_tiles = -(-R // block_rows)                 # cdiv
    tiles_per_split = -(-total_tiles // split)        # cdiv
    overflow = split * tiles_per_split > total_tiles  # odd tile count / tiny tensor
    need_row_mask = split * tiles_per_split * block_rows != R

    compute_reverse = float(reverse) > 0.0
    shared_temps = compute_reverse and float(temp_stu) == float(temp_tea)

    kernel = functools.partial(
        _bkl_kernel,
        inv_temp_f=1.0 / float(temp_stu),
        inv_temp_r=1.0 / float(temp_tea),
        compute_reverse=compute_reverse,
        shared_temps=shared_temps,
        rows_total=R,
        block_rows=block_rows,
        need_row_mask=need_row_mask,
    )

    if overflow:
        last_blk = total_tiles - 1
        in_map = lambda sp, i: (jnp.minimum(sp * tiles_per_split + i, last_blk), 0)
    else:
        in_map = lambda sp, i: (sp * tiles_per_split + i, 0)
    out_map = lambda sp, i: (sp, 0)

    depth = 3 if tiles_per_split >= 3 else 2
    in_specs = [_in_spec((block_rows, L), in_map, depth),
                _in_spec((block_rows, L), in_map, depth)]

    out_shapes = [jax.ShapeDtypeStruct((split * 8, 128), jnp.float32)]
    out_specs = [pl.BlockSpec((8, 128), out_map)]
    if compute_reverse:
        out_shapes.append(jax.ShapeDtypeStruct((split * 8, 128), jnp.float32))
        out_specs.append(pl.BlockSpec((8, 128), out_map))

    blk_f32 = 4 * block_rows * L
    blk_in = (s.dtype.itemsize + t.dtype.itemsize) * block_rows * L
    n_tmp = 12 if compute_reverse else 8        # softmax-math live temporaries (pessimistic)
    vmem_est = depth * blk_in + n_tmp * blk_f32 + (2 << 20)
    vmem_limit = int(min(vmem_cap_limit, max(32 << 20, vmem_est)))

    elems = R * L
    exp_passes = 2 if (not compute_reverse or shared_temps) else 4
    cost = pl.CostEstimate(
        flops=int(12 * elems * (2 if compute_reverse else 1)),
        transcendentals=int(exp_passes * elems),
        bytes_accessed=int(s.size * s.dtype.itemsize + t.size * t.dtype.itemsize
                           + len(out_shapes) * split * 8 * 128 * 4),
    )

    outs = pl.pallas_call(
        kernel,
        out_shape=tuple(out_shapes),
        grid_spec=pltpu.PrefetchScalarGridSpec(
            num_scalar_prefetch=0,
            grid=(split, tiles_per_split),
            in_specs=in_specs,
            out_specs=out_specs,
        ),
        compiler_params=pltpu.CompilerParams(
            dimension_semantics=("parallel", "arbitrary"),
            vmem_limit_bytes=vmem_limit),
        cost_estimate=cost,
    )(s, t)

    # Each core broadcast its scalar partial over its own (8,128) output tile.
    fwd = outs[0]
    kl_fwd = jnp.sum(fwd[::8, 0])
    kl_rev = jnp.sum(outs[1][::8, 0]) if compute_reverse else jnp.float32(0.0)

    nc = float(n * c)
    tf2 = float(temp_stu) ** 2
    tr2 = float(temp_tea) ** 2
    # Same scaling logic as the PyTorch module (kl_div(..., size_average=False) == sum).
    if isinstance(image_metas, float):
        loss = reverse * image_metas * kl_fwd * tf2 / nc
    else:
        loss = kl_fwd * tf2 / nc
    if compute_reverse:
        if isinstance(image_metas, float):
            loss = loss + reverse * (1.0 - image_metas) * kl_rev * tr2 / nc
        else:
            loss = loss + reverse * kl_rev * tr2 / nc
    return loss * weight


def _reference(preds_S, preds_T, image_metas, *, temp_stu, temp_tea, weight, reverse):
    """Pure-JAX reference mirroring the PyTorch forward."""
    n, c, h, w = preds_S.shape
    s = preds_S.astype(jnp.float32).reshape(n, c, -1)
    t = preds_T.astype(jnp.float32).reshape(n, c, -1)

    ls_s = jax.nn.log_softmax(s / temp_stu, axis=-1)
    p_t = jax.nn.softmax(t / temp_stu, axis=-1)
    kl_fwd = jnp.sum(p_t * (jnp.log(p_t) - ls_s))
    if isinstance(image_metas, float):
        loss = reverse * image_metas * kl_fwd * (temp_stu ** 2) / (n * c)
    else:
        loss = kl_fwd * (temp_stu ** 2) / (n * c)

    if reverse > 0:
        p_s = jax.nn.softmax(s / temp_tea, axis=-1)
        ls_t = jax.nn.log_softmax(t / temp_tea, axis=-1)
        kl_rev = jnp.sum(p_s * (jnp.log(p_s) - ls_t))
        if isinstance(image_metas, float):
            loss = loss + reverse * (1.0 - image_metas) * kl_rev * (temp_tea ** 2) / (n * c)
        else:
            loss = loss + reverse * kl_rev * (temp_tea ** 2) / (n * c)
    return loss * weight


if __name__ == "__main__":
    key = jax.random.PRNGKey(0)
    k1, k2, k3, k4, k5, k6, k7, k8 = jax.random.split(key, 8)

    # Case 1: small f32, different temps, reverse on, non-float image_metas.
    S1 = jax.random.normal(k1, (2, 4, 16, 16), jnp.float32)
    T1 = jax.random.normal(k2, (2, 4, 16, 16), jnp.float32)
    out1 = balance_kl_divergence(S1, T1, None, [{}], temp_stu=2.0, temp_tea=4.0,
                                 weight=1.0, reverse=0.5, name="neck_cwd")
    ref1 = _reference(S1, T1, [{}], temp_stu=2.0, temp_tea=4.0, weight=1.0, reverse=0.5)

    # Case 2: ragged rows (R=10), shared temps, float image_metas, forced small
    # block to exercise the in-kernel row mask and the 2-way core split.
    S2 = jax.random.normal(k3, (2, 5, 16, 16), jnp.float32)
    T2 = jax.random.normal(k4, (2, 5, 16, 16), jnp.float32)
    out2 = balance_kl_divergence(S2, T2, None, 0.3, temp_stu=2.0, temp_tea=2.0,
                                 weight=0.5, reverse=0.7, name="neck", block_rows=8)
    ref2 = _reference(S2, T2, 0.3, temp_stu=2.0, temp_tea=2.0, weight=0.5, reverse=0.7)

    # Case 3: larger bf16 inputs -> multi-tile grid, 2-way split, Buffered(3),
    # reverse off (single output).
    S3 = jax.random.normal(k5, (8, 128, 32, 32), jnp.float32).astype(jnp.bfloat16)
    T3 = jax.random.normal(k6, (8, 128, 32, 32), jnp.float32).astype(jnp.bfloat16)
    out3 = balance_kl_divergence(S3, T3, None, [{}], temp_stu=3.0, temp_tea=1.0,
                                 weight=2.0, reverse=0.0, name="neck")
    ref3 = _reference(S3, T3, [{}], temp_stu=3.0, temp_tea=1.0, weight=2.0, reverse=0.0)

    # Case 4: H*W = 289 (not a multiple of 128) -> exercises lane-ragged reductions.
    S4 = jax.random.normal(k7, (2, 4, 17, 17), jnp.float32)
    T4 = jax.random.normal(k8, (2, 4, 17, 17), jnp.float32)
    out4 = balance_kl_divergence(S4, T4, None, [{}], temp_stu=1.5, temp_tea=1.0,
                                 weight=1.0, reverse=0.3, name="neck")
    ref4 = _reference(S4, T4, [{}], temp_stu=1.5, temp_tea=1.0, weight=1.0, reverse=0.3)

    for got, ref in ((out1, ref1), (out2, ref2), (out3, ref3), (out4, ref4)):
        got = jax.block_until_ready(got)
        assert jnp.allclose(got, ref, rtol=2e-4, atol=1e-5), (float(got), float(ref))
    print("KERNEL_OK")
</pallas_src>

<mosaic_0001>
module attributes {stable_mosaic.version = 11 : i64} {
  func.func @_bkl_kernel(%arg0: i32, %arg1: i32, %arg2: memref<8x256xf32, #tpu.memory_space<vmem>>, %arg3: memref<8x256xf32, #tpu.memory_space<vmem>>, %arg4: memref<8x128xf32, #tpu.memory_space<vmem>>, %arg5: memref<8x128xf32, #tpu.memory_space<vmem>>) attributes {dimension_semantics = [#tpu.dimension_semantics<parallel>, #tpu.dimension_semantics<arbitrary>], iteration_bounds = array<i64: 1, 1>, scalar_prefetch = 0 : i64, scratch_operands = 0 : i64, tpu.core_type = #tpu.core_type<tc>, window_params = [{transform_indices = @transform_0, window_bounds = array<i64: 8, 256>}, {transform_indices = @transform_1, window_bounds = array<i64: 8, 256>}, {transform_indices = @transform_2, window_bounds = array<i64: 8, 128>}, {transform_indices = @transform_3, window_bounds = array<i64: 8, 128>}]} {
    %c0_i32 = arith.constant 0 : i32
    %0 = arith.cmpi eq, %arg1, %c0_i32 : i32
    %1 = arith.extui %0 : i1 to i32
    %c0_i32_0 = arith.constant 0 : i32
    %2 = arith.cmpi ne, %1, %c0_i32_0 : i32
    scf.if %2 {
      %cst_29 = arith.constant 0.000000e+00 : f32
      %83 = vector.broadcast %cst_29 : f32 to vector<8x128xf32>
      %c0_30 = arith.constant 0 : index
      %c0_31 = arith.constant 0 : index
      %84 = vector.load %arg4[%c0_30, %c0_31] : memref<8x128xf32, #tpu.memory_space<vmem>>, vector<8x128xf32>
      tpu.vector_store %arg4[%c0_30, %c0_31], %83 {strides = array<i32>} : memref<8x128xf32, #tpu.memory_space<vmem>>, vector<8x128xf32>,
      %cst_32 = arith.constant 0.000000e+00 : f32
      %85 = vector.broadcast %cst_32 : f32 to vector<8x128xf32>
      %c0_33 = arith.constant 0 : index
      %c0_34 = arith.constant 0 : index
      %86 = vector.load %arg5[%c0_33, %c0_34] : memref<8x128xf32, #tpu.memory_space<vmem>>, vector<8x128xf32>
      tpu.vector_store %arg5[%c0_33, %c0_34], %85 {strides = array<i32>} : memref<8x128xf32, #tpu.memory_space<vmem>>, vector<8x128xf32>,
    } else {
    }
    %c0 = arith.constant 0 : index
    %c0_1 = arith.constant 0 : index
    %3 = vector.load %arg2[%c0, %c0_1] : memref<8x256xf32, #tpu.memory_space<vmem>>, vector<8x256xf32>
    %c0_2 = arith.constant 0 : index
    %c0_3 = arith.constant 0 : index
    %4 = vector.load %arg3[%c0_2, %c0_3] : memref<8x256xf32, #tpu.memory_space<vmem>>, vector<8x256xf32>
    %cst = arith.constant 5.000000e-01 : f32
    %5 = vector.broadcast %cst : f32 to vector<8x256xf32>
    %6 = arith.mulf %4, %5 : vector<8x256xf32>
    %cst_4 = arith.constant dense<0xFF800000> : vector<8xf32>
    %7 = vector.multi_reduction <maximumf>, %6, %cst_4 [1] : vector<8x256xf32> to vector<8xf32>
    %8 = vector.shape_cast %7 : vector<8xf32> to vector<8x1xf32>
    %9 = vector.broadcast %8 : vector<8x1xf32> to vector<8x256xf32>
    %10 = arith.subf %6, %9 : vector<8x256xf32>
    %11 = math.exp %10 : vector<8x256xf32>
    %cst_5 = arith.constant dense<0.000000e+00> : vector<8xf32>
    %12 = vector.multi_reduction <add>, %11, %cst_5 [1] : vector<8x256xf32> to vector<8xf32>
    %13 = vector.shape_cast %12 : vector<8xf32> to vector<8x1xf32>
    %14 = math.log %13 : vector<8x1xf32>
    %15 = vector.broadcast %14 : vector<8x1xf32> to vector<8x256xf32>
    %16 = arith.subf %10, %15 : vector<8x256xf32>
    %cst_6 = arith.constant 1.000000e+00 : f32
    %17 = vector.broadcast %cst_6 : f32 to vector<8x1xf32>
    %18 = arith.divf %17, %13 : vector<8x1xf32>
    %19 = vector.broadcast %18 : vector<8x1xf32> to vector<8x256xf32>
    %20 = arith.mulf %11, %19 : vector<8x256xf32>
    %cst_7 = arith.constant 5.000000e-01 : f32
    %21 = vector.broadcast %cst_7 : f32 to vector<8x256xf32>
    %22 = arith.mulf %3, %21 : vector<8x256xf32>
    %cst_8 = arith.constant dense<0xFF800000> : vector<8xf32>
    %23 = vector.multi_reduction <maximumf>, %22, %cst_8 [1] : vector<8x256xf32> to vector<8xf32>
    %24 = vector.shape_cast %23 : vector<8xf32> to vector<8x1xf32>
    %25 = vector.broadcast %24 : vector<8x1xf32> to vector<8x256xf32>
    %26 = arith.subf %22, %25 : vector<8x256xf32>
    %27 = math.exp %26 : vector<8x256xf32>
    %cst_9 = arith.constant dense<0.000000e+00> : vector<8xf32>
    %28 = vector.multi_reduction <add>, %27, %cst_9 [1] : vector<8x256xf32> to vector<8xf32>
    %29 = vector.shape_cast %28 : vector<8xf32> to vector<8x1xf32>
    %30 = math.log %29 : vector<8x1xf32>
    %31 = vector.broadcast %30 : vector<8x1xf32> to vector<8x256xf32>
    %32 = arith.subf %26, %31 : vector<8x256xf32>
    %c0_10 = arith.constant 0 : index
    %c0_11 = arith.constant 0 : index
    %33 = vector.load %arg4[%c0_10, %c0_11] : memref<8x128xf32, #tpu.memory_space<vmem>>, vector<8x128xf32>
    %34 = arith.subf %16, %32 : vector<8x256xf32>
    %35 = arith.mulf %20, %34 : vector<8x256xf32>
    %cst_12 = arith.constant dense<0.000000e+00> : vector<8xf32>
    %36 = vector.multi_reduction <add>, %35, %cst_12 [1] : vector<8x256xf32> to vector<8xf32>
    %37 = vector.shape_cast %36 : vector<8xf32> to vector<8x1xf32>
    %cst_13 = arith.constant dense<0.000000e+00> : vector<1xf32>
    %38 = vector.multi_reduction <add>, %37, %cst_13 [0] : vector<8x1xf32> to vector<1xf32>
    %39 = vector.shape_cast %38 : vector<1xf32> to vector<1x1xf32>
    %40 = vector.shape_cast %39 : vector<1x1xf32> to vector<1x1xf32>
    %41 = vector.broadcast %40 : vector<1x1xf32> to vector<8x128xf32>
    %42 = arith.addf %33, %41 : vector<8x128xf32>
    %c0_14 = arith.constant 0 : index
    %c0_15 = arith.constant 0 : index
    %43 = vector.load %arg4[%c0_14, %c0_15] : memref<8x128xf32, #tpu.memory_space<vmem>>, vector<8x128xf32>
    tpu.vector_store %arg4[%c0_14, %c0_15], %42 {strides = array<i32>} : memref<8x128xf32, #tpu.memory_space<vmem>>, vector<8x128xf32>,
    %cst_16 = arith.constant 2.500000e-01 : f32
    %44 = vector.broadcast %cst_16 : f32 to vector<8x256xf32>
    %45 = arith.mulf %3, %44 : vector<8x256xf32>
    %cst_17 = arith.constant dense<0xFF800000> : vector<8xf32>
    %46 = vector.multi_reduction <maximumf>, %45, %cst_17 [1] : vector<8x256xf32> to vector<8xf32>
    %47 = vector.shape_cast %46 : vector<8xf32> to vector<8x1xf32>
    %48 = vector.broadcast %47 : vector<8x1xf32> to vector<8x256xf32>
    %49 = arith.subf %45, %48 : vector<8x256xf32>
    %50 = math.exp %49 : vector<8x256xf32>
    %cst_18 = arith.constant dense<0.000000e+00> : vector<8xf32>
    %51 = vector.multi_reduction <add>, %50, %cst_18 [1] : vector<8x256xf32> to vector<8xf32>
    %52 = vector.shape_cast %51 : vector<8xf32> to vector<8x1xf32>
    %53 = math.log %52 : vector<8x1xf32>
    %54 = vector.broadcast %53 : vector<8x1xf32> to vector<8x256xf32>
    %55 = arith.subf %49, %54 : vector<8x256xf32>
    %cst_19 = arith.constant 1.000000e+00 : f32
    %56 = vector.broadcast %cst_19 : f32 to vector<8x1xf32>
    %57 = arith.divf %56, %52 : vector<8x1xf32>
    %58 = vector.broadcast %57 : vector<8x1xf32> to vector<8x256xf32>
    %59 = arith.mulf %50, %58 : vector<8x256xf32>
    %cst_20 = arith.constant 2.500000e-01 : f32
    %60 = vector.broadcast %cst_20 : f32 to vector<8x256xf32>
    %61 = arith.mulf %4, %60 : vector<8x256xf32>
    %cst_21 = arith.constant dense<0xFF800000> : vector<8xf32>
    %62 = vector.multi_reduction <maximumf>, %61, %cst_21 [1] : vector<8x256xf32> to vector<8xf32>
    %63 = vector.shape_cast %62 : vector<8xf32> to vector<8x1xf32>
    %64 = vector.broadcast %63 : vector<8x1xf32> to vector<8x256xf32>
    %65 = arith.subf %61, %64 : vector<8x256xf32>
    %66 = math.exp %65 : vector<8x256xf32>
    %cst_22 = arith.constant dense<0.000000e+00> : vector<8xf32>
    %67 = vector.multi_reduction <add>, %66, %cst_22 [1] : vector<8x256xf32> to vector<8xf32>
    %68 = vector.shape_cast %67 : vector<8xf32> to vector<8x1xf32>
    %69 = math.log %68 : vector<8x1xf32>
    %70 = vector.broadcast %69 : vector<8x1xf32> to vector<8x256xf32>
    %71 = arith.subf %65, %70 : vector<8x256xf32>
    %c0_23 = arith.constant 0 : index
    %c0_24 = arith.constant 0 : index
    %72 = vector.load %arg5[%c0_23, %c0_24] : memref<8x128xf32, #tpu.memory_space<vmem>>, vector<8x128xf32>
    %73 = arith.subf %55, %71 : vector<8x256xf32>
    %74 = arith.mulf %59, %73 : vector<8x256xf32>
    %cst_25 = arith.constant dense<0.000000e+00> : vector<8xf32>
    %75 = vector.multi_reduction <add>, %74, %cst_25 [1] : vector<8x256xf32> to vector<8xf32>
    %76 = vector.shape_cast %75 : vector<8xf32> to vector<8x1xf32>
    %cst_26 = arith.constant dense<0.000000e+00> : vector<1xf32>
    %77 = vector.multi_reduction <add>, %76, %cst_26 [0] : vector<8x1xf32> to vector<1xf32>
    %78 = vector.shape_cast %77 : vector<1xf32> to vector<1x1xf32>
    %79 = vector.shape_cast %78 : vector<1x1xf32> to vector<1x1xf32>
    %80 = vector.broadcast %79 : vector<1x1xf32> to vector<8x128xf32>
    %81 = arith.addf %72, %80 : vector<8x128xf32>
    %c0_27 = arith.constant 0 : index
    %c0_28 = arith.constant 0 : index
    %82 = vector.load %arg5[%c0_27, %c0_28] : memref<8x128xf32, #tpu.memory_space<vmem>>, vector<8x128xf32>
    tpu.vector_store %arg5[%c0_27, %c0_28], %81 {strides = array<i32>} : memref<8x128xf32, #tpu.memory_space<vmem>>, vector<8x128xf32>,
    return
  }
  func.func @transform_0(%arg0: i32, %arg1: i32) -> (i32, i32) {
    %c1_i32 = arith.constant 1 : i32
    %0 = arith.muli %arg0, %c1_i32 : i32
    %1 = arith.addi %0, %arg1 : i32
    %c0_i32 = arith.constant 0 : i32
    %c0_i32_0 = arith.constant 0 : i32
    return %1, %c0_i32 : i32, i32
  }
  func.func @transform_1(%arg0: i32, %arg1: i32) -> (i32, i32) {
    %c1_i32 = arith.constant 1 : i32
    %0 = arith.muli %arg0, %c1_i32 : i32
    %1 = arith.addi %0, %arg1 : i32
    %c0_i32 = arith.constant 0 : i32
    %c0_i32_0 = arith.constant 0 : i32
    return %1, %c0_i32 : i32, i32
  }
  func.func @transform_2(%arg0: i32, %arg1: i32) -> (i32, i32) {
    %c0_i32 = arith.constant 0 : i32
    %c0_i32_0 = arith.constant 0 : i32
    return %arg0, %c0_i32 : i32, i32
  }
  func.func @transform_3(%arg0: i32, %arg1: i32) -> (i32, i32) {
    %c0_i32 = arith.constant 0 : i32
    %c0_i32_0 = arith.constant 0 : i32
    return %arg0, %c0_i32 : i32, i32
  }
}

</mosaic_0001>

<llo_original>
// kernel: tpu_custom_call.1
$region0: #{tpu_custom_call.1}
  #allocation0 [shape = 'u32[]', space=smem, size = 0x4, offset = 0x4, fixed_abs, tag = 'smem constant byte address 0x4 - core index']
  #allocation1 [shape = 'u32[144,128]{1,0:T(1,128)}', space=vmem, size = 0x12000, scoped, tag = 'internal scratch']
  %s0 = inlined_call_operand.hbm [shape: f32[8,256], index: 0, kind: input, shape index: {}]
  %s1 = inlined_call_operand.hbm [shape: f32[8,256], index: 1, kind: input, shape index: {}]
  %s2 = inlined_call_operand.hbm [shape: f32[8,128], index: 2, kind: output, shape index: {0}]
  %s3 = inlined_call_operand.hbm [shape: f32[8,128], index: 3, kind: output, shape index: {1}]
  %4 = xla_tuple %s2, %s3
  %s5 = sld [smem:[#allocation0]]
  $region38: #{tpu_custom_call.1} parent=0
    _
  %s7 = ssub.s32 1, %s5
  %s8 = scalar_select 0, %s7, %s5
  $region1: #{tpu_custom_call.1} parent=0
    #allocation2 [shape = 'u8[8192]{0}', space=vmem, size = 0x2000, scoped, tag = 'input window, operand 0, single buffered']
    #allocation3 [shape = 's32[1]{0}', space=sflag, size = 0x4, scoped, tag = 'scoped memory for tpu_custom_call.1']
    #allocation4 [shape = 's32[1]{0}', space=sflag, size = 0x4, scoped, tag = 'scoped memory for tpu_custom_call.1']
    #allocation5 [shape = 'u8[8192]{0}', space=vmem, size = 0x2000, scoped, tag = 'input window, operand 1, single buffered']
    #allocation6 [shape = 's32[1]{0}', space=sflag, size = 0x4, scoped, tag = 'scoped memory for tpu_custom_call.1']
    #allocation7 [shape = 'u8[4096]{0}', space=vmem, size = 0x1000, scoped, tag = 'output window, operand 0, single buffered']
    #allocation8 [shape = 'u8[4096]{0}', space=vmem, size = 0x1000, scoped, tag = 'output window, operand 1, single buffered']
    #allocation9 [shape = 's32[1]{0}', space=sflag, size = 0x4, scoped, tag = 'scoped memory for tpu_custom_call.1']
    %9 = vsyncpa [#allocation3], 0
    %10 = vsyncpa [#allocation6], 0
    %11 = vsyncpa [#allocation4], 0
    %12 = vsyncpa [#allocation9], 0
    // Predicated region
    $region2: #{tpu_custom_call.1} parent=1 // pred_check
      _
    $region3: #{tpu_custom_call.1} parent=1 // pred_check_branch
      %14 = sbr.rel (0) target = $region5
    $region4: #{tpu_custom_call.1} parent=1 // pred_region
      %s15 = sadd.s32 0, 0
      %s17 = ssub.s32 256, 256
      %18 = vsyncadd [#allocation3], %s17
      %s19 = smul.addr %s15, 2
      %s20 = smul.addr %s19, 128
      %s21 = scalar_lea.hbm %s0, %s20
      %s23 = sshll.u32 [#allocation2], 4
      %s24 = int_to_ptr.vmem [resolvable:$true] %s23
      %26 = dma.hbm_to_vmem [thread:$0]  %s21, 256, %s24, [#allocation3]
    $region5: #{tpu_custom_call.1} parent=1 // pred_fallthru
      _
    // Predicated region
    $region6: #{tpu_custom_call.1} parent=1 // pred_check
      _
    $region7: #{tpu_custom_call.1} parent=1 // pred_check_branch
      %28 = sbr.rel (0) target = $region9
    $region8: #{tpu_custom_call.1} parent=1 // pred_region
      %s29 = sadd.s32 0, 0
      %s31 = ssub.s32 256, 256
      %32 = vsyncadd [#allocation6], %s31
      %s33 = smul.addr %s29, 2
      %s34 = smul.addr %s33, 128
      %s35 = scalar_lea.hbm %s1, %s34
      %s37 = sshll.u32 [#allocation5], 4
      %s38 = int_to_ptr.vmem [resolvable:$true] %s37
      %40 = dma.hbm_to_vmem [thread:$0]  %s35, 256, %s38, [#allocation6]
    $region9: #{tpu_custom_call.1} parent=1 // pred_fallthru
      _
    // Predicated region
    $region10: #{tpu_custom_call.1} parent=1 // pred_check
      _
    $region11: #{tpu_custom_call.1} parent=1 // pred_check_branch
      %42 = sbr.rel (0) target = $region13
    $region12: #{tpu_custom_call.1} parent=1 // pred_region
      %43 = dma.done [#allocation3], 256
    $region13: #{tpu_custom_call.1} parent=1 // pred_fallthru
      _
    // Predicated region
    $region14: #{tpu_custom_call.1} parent=1 // pred_check
      _
    $region15: #{tpu_custom_call.1} parent=1 // pred_check_branch
      %45 = sbr.rel (0) target = $region17
    $region16: #{tpu_custom_call.1} parent=1 // pred_region
      %46 = dma.done [#allocation6], 256
    $region17: #{tpu_custom_call.1} parent=1 // pred_fallthru
      _
    %s47 = sadd.s32 0, 0
    %s48 = sadd.s32 0, 0
    %p49 = scmp.eq.s32.totalorder 0, 0
    // Predicated region
    $region18: #{tpu_custom_call.1} parent=1 // pred_check
      %p50 = pneg %p49
    $region19: #{tpu_custom_call.1} parent=1 // pred_check_branch
      %52 = sbr.rel (%p50) target = $region21
    $region20: #{tpu_custom_call.1} parent=1 // pred_region
      %53 = vst [vmem:[#allocation7] sm:$0xff] 0.0
      %54 = vst [vmem:[#allocation8] sm:$0xff] 0.0
    $region21: #{tpu_custom_call.1} parent=1 // pred_fallthru
      _
    %v55 = vld [vmem:[#allocation2] sm:$0xff]
    %v56 = vld [vmem:[#allocation2 + $0x8] sm:$0xff]
    %v57 = vld [vmem:[#allocation5] sm:$0xff]
    %v58 = vld [vmem:[#allocation5 + $0x8] sm:$0xff]
    %v59 = vmul.f32 %v57, 0.5
    %v60 = vmul.f32 %v58, 0.5
    %v61 = vmax.f32 %v59, %v60
    %62 = vmax.xlane.f32.xlu0 %v61
    %v63 = vpop.xlane.xlu0 %62
    %v64 = vsub.f32 %v59, %v63
    %v65 = vsub.f32 %v60, %v63
    %v66 = vmul.f32 %v64, 1.442695
    %v67 = vpow.pop %v66
    %v68 = vmul.f32 %v65, 1.442695
    %v69 = vpow.pop %v68
    %v70 = vadd.f32 %v67, %v69
    %71 = vadd.xlane.f32.xlu0 %v70
    %v72 = vpop.xlane.xlu0 %71
    %v73 = vlog2.pop %v72
    %v74 = vmul.f32 %v73, 0.6931472
    %v75 = vsub.f32 %v64, %v74
    %v76 = vsub.f32 %v65, %v74
    %v77 = vrcp.pop %v72
    %v78 = vmul.f32 1.0, %v77
    %v79 = vmul.f32 %v67, %v78
    %v80 = vmul.f32 %v69, %v78
    %v81 = vmul.f32 %v55, 0.5
    %v82 = vmul.f32 %v56, 0.5
    %v83 = vmax.f32 %v81, %v82
    %84 = vmax.xlane.f32.xlu0 %v83
    %v85 = vpop.xlane.xlu0 %84
    %v86 = vsub.f32 %v81, %v85
    %v87 = vsub.f32 %v82, %v85
    %v88 = vmul.f32 %v86, 1.442695
    %v89 = vpow.pop %v88
    %v90 = vmul.f32 %v87, 1.442695
    %v91 = vpow.pop %v90
    %v92 = vadd.f32 %v89, %v91
    %93 = vadd.xlane.f32.xlu0 %v92
    %v94 = vpop.xlane.xlu0 %93
    %v95 = vlog2.pop %v94
    %v96 = vmul.f32 %v95, 0.6931472
    %v97 = vsub.f32 %v86, %v96
    %v98 = vsub.f32 %v87, %v96
    %v99 = vld [vmem:[#allocation7] sm:$0xff]
    %v100 = vsub.f32 %v75, %v97
    %v101 = vsub.f32 %v76, %v98
    %v102 = vmul.f32 %v79, %v100
    %v103 = vmul.f32 %v80, %v101
    %v104 = vadd.f32 %v102, %v103
    %105 = vadd.xlane.f32.xlu0 %v104
    %v106 = vpop.xlane.xlu0 %105
    %v107 = vrot.slane %v106, 4
    %v108 = vadd.f32 %v106, %v107
    %v109 = vrot.slane %v108, 2
    %v110 = vadd.f32 %v108, %v109
    %v111 = vrot.slane %v110, 1
    %v112 = vadd.f32 %v110, %v111
    %v113 = vadd.f32 %v99, %v112
    %114 = vst [vmem:[#allocation7] sm:$0xff] %v113
    %v115 = vmul.f32 %v55, 0.25
    %v116 = vmul.f32 %v56, 0.25
    %v117 = vmax.f32 %v115, %v116
    %118 = vmax.xlane.f32.xlu0 %v117
    %v119 = vpop.xlane.xlu0 %118
    %v120 = vsub.f32 %v115, %v119
    %v121 = vsub.f32 %v116, %v119
    %v122 = vmul.f32 %v120, 1.442695
    %v123 = vpow.pop %v122
    %v124 = vmul.f32 %v121, 1.442695
    %v125 = vpow.pop %v124
    %v126 = vadd.f32 %v123, %v125
    %127 = vadd.xlane.f32.xlu0 %v126
    %v128 = vpop.xlane.xlu0 %127
    %v129 = vlog2.pop %v128
    %v130 = vmul.f32 %v129, 0.6931472
    %v131 = vsub.f32 %v120, %v130
    %v132 = vsub.f32 %v121, %v130
    %v133 = vrcp.pop %v128
    %v134 = vmul.f32 1.0, %v133
    %v135 = vmul.f32 %v123, %v134
    %v136 = vmul.f32 %v125, %v134
    %v137 = vmul.f32 %v57, 0.25
    %v138 = vmul.f32 %v58, 0.25
    %v139 = vmax.f32 %v137, %v138
    %140 = vmax.xlane.f32.xlu0 %v139
    %v141 = vpop.xlane.xlu0 %140
    %v142 = vsub.f32 %v137, %v141
    %v143 = vsub.f32 %v138, %v141
    %v144 = vmul.f32 %v142, 1.442695
    %v145 = vpow.pop %v144
    %v146 = vmul.f32 %v143, 1.442695
    %v147 = vpow.pop %v146
    %v148 = vadd.f32 %v145, %v147
    %149 = vadd.xlane.f32.xlu0 %v148
    %v150 = vpop.xlane.xlu0 %149
    %v151 = vlog2.pop %v150
    %v152 = vmul.f32 %v151, 0.6931472
    %v153 = vsub.f32 %v142, %v152
    %v154 = vsub.f32 %v143, %v152
    %v155 = vld [vmem:[#allocation8] sm:$0xff]
    %v156 = vsub.f32 %v131, %v153
    %v157 = vsub.f32 %v132, %v154
    %v158 = vmul.f32 %v135, %v156
    %v159 = vmul.f32 %v136, %v157
    %v160 = vadd.f32 %v158, %v159
    %161 = vadd.xlane.f32.xlu0 %v160
    %v162 = vpop.xlane.xlu0 %161
    %v163 = vrot.slane %v162, 4
    %v164 = vadd.f32 %v162, %v163
    %v165 = vrot.slane %v164, 2
    %v166 = vadd.f32 %v164, %v165
    %v167 = vrot.slane %v166, 1
    %v168 = vadd.f32 %v166, %v167
    %v169 = vadd.f32 %v155, %v168
    %170 = vst [vmem:[#allocation8] sm:$0xff] %v169
    // Predicated region
    $region22: #{tpu_custom_call.1} parent=1 // pred_check
      _
    $region23: #{tpu_custom_call.1} parent=1 // pred_check_branch
      %172 = sbr.rel (0) target = $region25
    $region24: #{tpu_custom_call.1} parent=1 // pred_region
      %s174 = ssub.s32 128, 128
      %175 = vsyncadd [#allocation4], %s174
      %s177 = sshll.u32 [#allocation7], 4
      %s178 = int_to_ptr.vmem [resolvable:$true] %s177
      %180 = dma.vmem_to_hbm [thread:$0]  %s178, 128, %s2, [#allocation4]
    $region25: #{tpu_custom_call.1} parent=1 // pred_fallthru
      _
    // Predicated region
    $region26: #{tpu_custom_call.1} parent=1 // pred_check
      _
    $region27: #{tpu_custom_call.1} parent=1 // pred_check_branch
      %182 = sbr.rel (0) target = $region29
    $region28: #{tpu_custom_call.1} parent=1 // pred_region
      %s184 = ssub.s32 128, 128
      %185 = vsyncadd [#allocation9], %s184
      %s187 = sshll.u32 [#allocation8], 4
      %s188 = int_to_ptr.vmem [resolvable:$true] %s187
      %190 = dma.vmem_to_hbm [thread:$0]  %s188, 128, %s3, [#allocation9]
    $region29: #{tpu_custom_call.1} parent=1 // pred_fallthru
      _
    // Predicated region
    $region30: #{tpu_custom_call.1} parent=1 // pred_check
      _
    $region31: #{tpu_custom_call.1} parent=1 // pred_check_branch
      %192 = sbr.rel (0) target = $region33
    $region32: #{tpu_custom_call.1} parent=1 // pred_region
      %193 = dma.done [#allocation4], 128
    $region33: #{tpu_custom_call.1} parent=1 // pred_fallthru
      _
    // Predicated region
    $region34: #{tpu_custom_call.1} parent=1 // pred_check
      _
    $region35: #{tpu_custom_call.1} parent=1 // pred_check_branch
      %195 = sbr.rel (0) target = $region37
    $region36: #{tpu_custom_call.1} parent=1 // pred_region
      %196 = dma.done [#allocation9], 128
    $region37: #{tpu_custom_call.1} parent=1 // pred_fallthru
      _
    %197 = vsyncpa [#allocation3], 1
    %198 = vsyncpa [#allocation6], 1
    %199 = vsyncpa [#allocation4], 1
    %200 = vsyncpa [#allocation9], 1

</llo_original>
